<compile_context>
chip_gen: v7x
topology: tpu7x:2x2x1
jax: 0.10.0
libtpu: 0.0.40
codegen_flags: <defaults>
</compile_context>

<pallas_src>
from functools import lru_cache, partial

import numpy as np

import jax
import jax.numpy as jnp
from jax.experimental import pallas as pl
from jax.experimental.pallas import tpu as pltpu


# ----------------------------------------------------------------------------
# Static (host-side, hoisted) precompute of the bicubic interpolation operator.
# ----------------------------------------------------------------------------
def _bicubic_matrix_np(in_size: int, out_size: int, a: float = -0.75) -> np.ndarray:
    """A[out, in] s.t. A @ v == 1-D bicubic resize of v (PyTorch cubic
    convolution, align_corners=True, border handled by index clamping)."""
    if out_size > 1:
        scale = (in_size - 1) / (out_size - 1)
    else:
        scale = 0.0
    src = np.arange(out_size, dtype=np.float64) * scale
    x0 = np.floor(src)
    t = src - x0

    def c1(x):  # |x| <= 1
        return ((a + 2.0) * x - (a + 3.0)) * x * x + 1.0

    def c2(x):  # 1 < |x| < 2
        return ((a * x - 5.0 * a) * x + 8.0 * a) * x - 4.0 * a

    w = np.stack([c2(t + 1.0), c1(t), c1(1.0 - t), c2(2.0 - t)], axis=-1)  # [out, 4]
    idx = x0.astype(np.int64)[:, None] + np.arange(-1, 3)[None, :]         # [out, 4]
    idx = np.clip(idx, 0, in_size - 1)

    A = np.zeros((out_size, in_size), dtype=np.float64)
    np.add.at(A, (np.repeat(np.arange(out_size), 4), idx.reshape(-1)), w.reshape(-1))
    return A.astype(np.float32)


@lru_cache(maxsize=None)
def _resize_operator(in_hw, out_hw):
    """K = kron(A_h, A_w): [Ho*Wo, H*W] so that (K @ feat2d) == bicubic resize
    of feat (both spatial index pairs flattened row-major)."""
    A_h = _bicubic_matrix_np(in_hw[0], out_hw[0])
    A_w = _bicubic_matrix_np(in_hw[1], out_hw[1])
    return jnp.asarray(np.kron(A_h, A_w).astype(np.float32))


# ----------------------------------------------------------------------------
# Fused Pallas kernel: projection + separable-bicubic resize, two MXU matmuls.
# ----------------------------------------------------------------------------
def _fused_adapter_kernel(x_ref, w_ref, k_ref, o_ref):
    # x_ref: [H*W, C]   w_ref: [C, D]   k_ref: [Ho*Wo, H*W]   o_ref: [Ho*Wo, D]
    feat = jnp.dot(x_ref[...], w_ref[...], preferred_element_type=jnp.float32)
    o_ref[...] = jnp.dot(k_ref[...], feat, preferred_element_type=jnp.float32)


def _fused_adapter_call(x2d, weight, kmat):
    HW, C = x2d.shape
    D = weight.shape[1]
    HoWo = kmat.shape[0]
    flops = 2 * HW * C * D + 2 * HoWo * HW * D
    bytes_accessed = 4 * (HW * C + C * D + HoWo * HW + HoWo * D)
    return pl.pallas_call(
        _fused_adapter_kernel,
        out_shape=jax.ShapeDtypeStruct((HoWo, D), jnp.float32),
        in_specs=[pl.BlockSpec(memory_space=pltpu.MemorySpace.VMEM)] * 3,
        out_specs=pl.BlockSpec(memory_space=pltpu.MemorySpace.VMEM),
        cost_estimate=pl.CostEstimate(
            flops=flops, transcendentals=0, bytes_accessed=bytes_accessed
        ),
    )(x2d.astype(jnp.float32), weight.astype(jnp.float32), kmat)


@partial(jax.jit, static_argnames=("output_size",))
def adapter_forward(x, weight, output_size):
    """Adapter.forward: x [H,W,C] -> einsum('hwc,cd->hwd') -> bicubic resize
    (align_corners=True) to output_size -> [Ho, Wo, D]."""
    H, W, C = x.shape
    D = weight.shape[1]
    Ho, Wo = output_size
    kmat = _resize_operator((H, W), (Ho, Wo))          # static [Ho*Wo, H*W]
    out2d = _fused_adapter_call(x.reshape(H * W, C), weight, kmat)
    return out2d.reshape(Ho, Wo, D)                    # free row-major reshape


# ----------------------------------------------------------------------------
# Self-test
# ----------------------------------------------------------------------------
if __name__ == "__main__":
    key = jax.random.PRNGKey(0)
    k_x, k_w = jax.random.split(key)

    # Small shapes consistent with the module:
    #   render feature map x: [H, W, C] (render_feature_dim = C)
    #   gt_feature_shape = [Ho, Wo, D] -> output_size = (Ho, Wo), weight [C, D]
    H, W, C = 8, 8, 8
    gt_feature_shape = (16, 16, 32)
    Ho, Wo, D = gt_feature_shape
    output_size = (Ho, Wo)

    x = jax.random.normal(k_x, (H, W, C), dtype=jnp.float32)
    # weight ~ Normal(0, 0.02), deterministic in-script (matches nn.Parameter init).
    weight = 0.02 * jax.random.normal(k_w, (C, D), dtype=jnp.float32)

    out = adapter_forward(x, weight, output_size)
    out = jax.block_until_ready(out)
    assert out.shape == (Ho, Wo, D), out.shape

    # Pure-JAX reference of the identical math (validates the fused kernel and
    # the Kronecker factorization of the separable bicubic resize).
    A_h = jnp.asarray(_bicubic_matrix_np(H, Ho))
    A_w = jnp.asarray(_bicubic_matrix_np(W, Wo))
    feat_ref = jnp.einsum('hwc,cd->hwd', x, weight)
    ref = jnp.einsum('ih,jw,hwd->ijd', A_h, A_w, feat_ref)
    assert jnp.allclose(out, ref, atol=1e-4, rtol=1e-4)

    print("KERNEL_OK")
</pallas_src>

<mosaic_0001>
module attributes {stable_mosaic.version = 11 : i64} {
  func.func @_fused_adapter_kernel(%arg0: memref<64x8xf32, #tpu.memory_space<vmem>>, %arg1: memref<8x32xf32, #tpu.memory_space<vmem>>, %arg2: memref<256x64xf32, #tpu.memory_space<vmem>>, %arg3: memref<256x32xf32, #tpu.memory_space<vmem>>) attributes {dimension_semantics = [], scalar_prefetch = 0 : i64, scratch_operands = 0 : i64, tpu.core_type = #tpu.core_type<tc>} {
    %c0 = arith.constant 0 : index
    %c0_0 = arith.constant 0 : index
    %0 = vector.load %arg0[%c0, %c0_0] : memref<64x8xf32, #tpu.memory_space<vmem>>, vector<64x8xf32>
    %c0_1 = arith.constant 0 : index
    %c0_2 = arith.constant 0 : index
    %1 = vector.load %arg1[%c0_1, %c0_2] : memref<8x32xf32, #tpu.memory_space<vmem>>, vector<8x32xf32>
    %cst = arith.constant dense<0.000000e+00> : vector<64x32xf32>
    %2 = tpu.matmul %0, %1, %cst {dimension_numbers = #tpu.dot_dimension_numbers<[1], [0], [0], [1], [0, 0, 1, 1], [], []>} : vector<64x8xf32>, vector<8x32xf32>, vector<64x32xf32> -> vector<64x32xf32>
    %c0_3 = arith.constant 0 : index
    %c0_4 = arith.constant 0 : index
    %3 = vector.load %arg2[%c0_3, %c0_4] : memref<256x64xf32, #tpu.memory_space<vmem>>, vector<256x64xf32>
    %cst_5 = arith.constant dense<0.000000e+00> : vector<256x32xf32>
    %4 = tpu.matmul %3, %2, %cst_5 {dimension_numbers = #tpu.dot_dimension_numbers<[1], [0], [0], [1], [0, 0, 1, 1], [], []>} : vector<256x64xf32>, vector<64x32xf32>, vector<256x32xf32> -> vector<256x32xf32>
    %c0_6 = arith.constant 0 : index
    %c0_7 = arith.constant 0 : index
    %5 = vector.load %arg3[%c0_6, %c0_7] : memref<256x32xf32, #tpu.memory_space<vmem>>, vector<256x32xf32>
    tpu.vector_store %arg3[%c0_6, %c0_7], %4 {strides = array<i32>} : memref<256x32xf32, #tpu.memory_space<vmem>>, vector<256x32xf32>,
    return
  }
}

</mosaic_0001>

<llo_original>
// kernel: adapter_forward.1
$region0: #{adapter_forward.1}
  #allocation0 [shape = 'u32[]', space=smem, size = 0x4, offset = 0x4, fixed_abs, tag = 'smem constant byte address 0x4 - core index']
  #allocation1 [shape = 'u32[144,128]{1,0:T(1,128)}', space=vmem, size = 0x12000, scoped, tag = 'internal scratch']
  %s0 = inlined_call_operand.hbm [shape: f32[64,8], index: 0, kind: input, shape index: {}]
  %s1 = inlined_call_operand.hbm [shape: f32[8,32], index: 1, kind: input, shape index: {}]
  %s2 = inlined_call_operand.hbm [shape: f32[256,64], index: 2, kind: input, shape index: {}]
  %s3 = inlined_call_operand.hbm [shape: f32[256,32], index: 3, kind: output, shape index: {}]
  %s4 = sld [smem:[#allocation0]]
  $region34: #{adapter_forward.1} parent=0
    _
  %s6 = ssub.s32 1, %s4
  %s7 = scalar_select 0, %s6, %s4
  $region1: #{adapter_forward.1} parent=0
    #allocation2 [shape = 'u8[32768]{0}', space=vmem, size = 0x8000, scoped, tag = 'input window, operand 0, single buffered']
    #allocation3 [shape = 's32[1]{0}', space=sflag, size = 0x4, scoped, tag = 'scoped memory for adapter_forward.1']
    #allocation4 [shape = 's32[1]{0}', space=sflag, size = 0x4, scoped, tag = 'scoped memory for adapter_forward.1']
    #allocation5 [shape = 'u8[4096]{0}', space=vmem, size = 0x1000, scoped, tag = 'input window, operand 1, single buffered']
    #allocation6 [shape = 's32[1]{0}', space=sflag, size = 0x4, scoped, tag = 'scoped memory for adapter_forward.1']
    #allocation7 [shape = 'u8[131072]{0}', space=vmem, size = 0x20000, scoped, tag = 'input window, operand 2, single buffered']
    #allocation8 [shape = 'u8[131072]{0}', space=vmem, size = 0x20000, scoped, tag = 'output window, operand 0, single buffered']
    %8 = vsyncpa [#allocation3], 0
    %9 = vsyncpa [#allocation6], 0
    %10 = vsyncpa [#allocation4], 0
    // Predicated region
    $region2: #{adapter_forward.1} parent=1 // pred_check
      _
    $region3: #{adapter_forward.1} parent=1 // pred_check_branch
      %12 = sbr.rel (0) target = $region5
    $region4: #{adapter_forward.1} parent=1 // pred_region
      %s14 = ssub.s32 1024, 1024
      %15 = vsyncadd [#allocation3], %s14
      %s16 = sshll.u32 [#allocation2], 4
      %s17 = int_to_ptr.vmem [resolvable:$true] %s16
      %22 = dma.hbm_to_vmem [thread:$0]  %s0, 1024, %s17, [#allocation3], 128, 128, 8
    $region5: #{adapter_forward.1} parent=1 // pred_fallthru
      _
    // Predicated region
    $region6: #{adapter_forward.1} parent=1 // pred_check
      _
    $region7: #{adapter_forward.1} parent=1 // pred_check_branch
      %24 = sbr.rel (0) target = $region9
    $region8: #{adapter_forward.1} parent=1 // pred_region
      %s26 = ssub.s32 128, 128
      %27 = vsyncadd [#allocation6], %s26
      %s29 = sshll.u32 [#allocation5], 4
      %s30 = int_to_ptr.vmem [resolvable:$true] %s29
      %32 = dma.hbm_to_vmem [thread:$0]  %s1, 128, %s30, [#allocation6]
    $region9: #{adapter_forward.1} parent=1 // pred_fallthru
      _
    // Predicated region
    $region10: #{adapter_forward.1} parent=1 // pred_check
      _
    $region11: #{adapter_forward.1} parent=1 // pred_check_branch
      %34 = sbr.rel (0) target = $region13
    $region12: #{adapter_forward.1} parent=1 // pred_region
      %s36 = ssub.s32 4096, 4096
      %37 = vsyncadd [#allocation6], %s36
      %s38 = sshll.u32 [#allocation7], 4
      %s39 = int_to_ptr.vmem [resolvable:$true] %s38
      %44 = dma.hbm_to_vmem [thread:$0]  %s2, 4096, %s39, [#allocation6], 128, 128, 8
    $region13: #{adapter_forward.1} parent=1 // pred_fallthru
      _
    // Predicated region
    $region14: #{adapter_forward.1} parent=1 // pred_check
      _
    $region15: #{adapter_forward.1} parent=1 // pred_check_branch
      %46 = sbr.rel (0) target = $region17
    $region16: #{adapter_forward.1} parent=1 // pred_region
      %47 = dma.done [#allocation3], 1024
    $region17: #{adapter_forward.1} parent=1 // pred_fallthru
      _
    // Predicated region
    $region18: #{adapter_forward.1} parent=1 // pred_check
      _
    $region19: #{adapter_forward.1} parent=1 // pred_check_branch
      %49 = sbr.rel (0) target = $region21
    $region20: #{adapter_forward.1} parent=1 // pred_region
      %50 = dma.done [#allocation6], 128
    $region21: #{adapter_forward.1} parent=1 // pred_fallthru
      _
    // Predicated region
    $region22: #{adapter_forward.1} parent=1 // pred_check
      _
    $region23: #{adapter_forward.1} parent=1 // pred_check_branch
      %52 = sbr.rel (0) target = $region25
    $region24: #{adapter_forward.1} parent=1 // pred_region
      %53 = dma.done [#allocation6], 4096
    $region25: #{adapter_forward.1} parent=1 // pred_fallthru
      _
    %v54 = vld [vmem:[#allocation2] sm:$0xff]
    %v55 = vld [vmem:[#allocation2 + $0x8] sm:$0xff]
    %v56 = vld [vmem:[#allocation2 + $0x10] sm:$0xff]
    %v57 = vld [vmem:[#allocation2 + $0x18] sm:$0xff]
    %v58 = vld [vmem:[#allocation2 + $0x20] sm:$0xff]
    %v59 = vld [vmem:[#allocation2 + $0x28] sm:$0xff]
    %v60 = vld [vmem:[#allocation2 + $0x30] sm:$0xff]
    %v61 = vld [vmem:[#allocation2 + $0x38] sm:$0xff]
    %v62 = vld [vmem:[#allocation5] sm:$0xff]
    %vm63 = vcmask 64512
    %v65 = vsel %vm63, %v54, 0
    %v68 = vsel %vm63, %v55, 0
    %v71 = vsel %vm63, %v56, 0
    %v74 = vsel %vm63, %v57, 0
    %v77 = vsel %vm63, %v58, 0
    %v80 = vsel %vm63, %v59, 0
    %v83 = vsel %vm63, %v60, 0
    %v86 = vsel %vm63, %v61, 0
    %88 = vmatprep.subr.mxu0 0.0
    %89 = vmatpush1.msra.mxu0 %v62
    %90 = vmatprep.subr.mxu0 0.0
    %91 = vmatpush1.msra.mxu0 0.0
    %92 = vmatprep.subr.mxu0 0.0
    %93 = vmatpush1.msra.mxu0 0.0
    %94 = vmatprep.subr.mxu0 0.0
    %95 = vmatpush1.msra.mxu0 0.0
    %96 = vmatprep.subr.mxu0 0.0
    %97 = vmatpush1.msra.mxu0 0.0
    %98 = vmatprep.subr.mxu0 0.0
    %99 = vmatpush1.msra.mxu0 0.0
    %100 = vmatprep.subr.mxu0 0.0
    %101 = vmatpush1.msra.mxu0 0.0
    %102 = vmatprep.subr.mxu0 0.0
    %103 = vmatpush1.msra.mxu0 0.0
    %104 = vmatprep.subr.mxu0 0.0
    %105 = vmatpush1.msra.mxu0 0.0
    %106 = vmatprep.subr.mxu0 0.0
    %107 = vmatpush1.msra.mxu0 0.0
    %108 = vmatprep.subr.mxu0 0.0
    %109 = vmatpush1.msra.mxu0 0.0
    %110 = vmatprep.subr.mxu0 0.0
    %111 = vmatpush1.msra.mxu0 0.0
    %112 = vmatprep.subr.mxu0 0.0
    %113 = vmatpush1.msra.mxu0 0.0
    %114 = vmatprep.subr.mxu0 0.0
    %115 = vmatpush1.msra.mxu0 0.0
    %116 = vmatprep.subr.mxu0 0.0
    %117 = vmatpush1.msra.mxu0 0.0
    %118 = vmatprep.subr.mxu0 0.0
    %119 = vmatpush1.msra.mxu0 0.0
    %120 = vmatprep.subr.mxu0 0.0
    %121 = vmatpush1.msra.mxu0 0.0
    %122 = vmatprep.subr.mxu0 0.0
    %123 = vmatpush1.msra.mxu0 0.0
    %124 = vmatprep.subr.mxu0 0.0
    %125 = vmatpush1.msra.mxu0 0.0
    %126 = vmatprep.subr.mxu0 0.0
    %127 = vmatpush1.msra.mxu0 0.0
    %128 = vmatprep.subr.mxu0 0.0
    %129 = vmatpush1.msra.mxu0 0.0
    %130 = vmatprep.subr.mxu0 0.0
    %131 = vmatpush1.msra.mxu0 0.0
    %132 = vmatprep.subr.mxu0 0.0
    %133 = vmatpush1.msra.mxu0 0.0
    %134 = vmatprep.subr.mxu0 0.0
    %135 = vmatpush1.msra.mxu0 0.0
    %136 = vmatprep.subr.mxu0 0.0
    %137 = vmatpush1.msra.mxu0 0.0
    %138 = vmatprep.subr.mxu0 0.0
    %139 = vmatpush1.msra.mxu0 0.0
    %140 = vmatprep.subr.mxu0 0.0
    %141 = vmatpush1.msra.mxu0 0.0
    %142 = vmatprep.subr.mxu0 0.0
    %143 = vmatpush1.msra.mxu0 0.0
    %144 = vmatprep.subr.mxu0 0.0
    %145 = vmatpush1.msra.mxu0 0.0
    %146 = vmatprep.subr.mxu0 0.0
    %147 = vmatpush1.msra.mxu0 0.0
    %148 = vmatprep.subr.mxu0 0.0
    %149 = vmatpush1.msra.mxu0 0.0
    %150 = vmatprep.subr.mxu0 0.0
    %151 = vmatpush1.msra.mxu0 0.0
    %152 = vmatprep.mubr.f32.mxu0 0.0
    %153 = vmatmul.mubr.f32.gmra.mrb[0].mxu0 %v65
    %v154 = vpop.f32.mrb[0].mxu0
    %v155 = vadd.f32 0.0, %v154
    %v156 = vpop.f32.mrb[0].mxu0
    %157 = vmatprep.mubr.f32.mxu0 0.0
    %158 = vmatmul.mubr.f32.gmra.mrb[0].mxu0 %v68
    %v159 = vpop.f32.mrb[0].mxu0
    %v160 = vadd.f32 0.0, %v159
    %v161 = vpop.f32.mrb[0].mxu0
    %162 = vmatprep.mubr.f32.mxu0 0.0
    %163 = vmatmul.mubr.f32.gmra.mrb[0].mxu0 %v71
    %v164 = vpop.f32.mrb[0].mxu0
    %v165 = vadd.f32 0.0, %v164
    %v166 = vpop.f32.mrb[0].mxu0
    %167 = vmatprep.mubr.f32.mxu0 0.0
    %168 = vmatmul.mubr.f32.gmra.mrb[0].mxu0 %v74
    %v169 = vpop.f32.mrb[0].mxu0
    %v170 = vadd.f32 0.0, %v169
    %v171 = vpop.f32.mrb[0].mxu0
    %172 = vmatprep.mubr.f32.mxu0 0.0
    %173 = vmatmul.mubr.f32.gmra.mrb[0].mxu0 %v77
    %v174 = vpop.f32.mrb[0].mxu0
    %v175 = vadd.f32 0.0, %v174
    %v176 = vpop.f32.mrb[0].mxu0
    %177 = vmatprep.mubr.f32.mxu0 0.0
    %178 = vmatmul.mubr.f32.gmra.mrb[0].mxu0 %v80
    %v179 = vpop.f32.mrb[0].mxu0
    %v180 = vadd.f32 0.0, %v179
    %v181 = vpop.f32.mrb[0].mxu0
    %182 = vmatprep.mubr.f32.mxu0 0.0
    %183 = vmatmul.mubr.f32.gmra.mrb[0].mxu0 %v83
    %v184 = vpop.f32.mrb[0].mxu0
    %v185 = vadd.f32 0.0, %v184
    %v186 = vpop.f32.mrb[0].mxu0
    %187 = vmatprep.mubr.f32.mxu0 0.0
    %188 = vmatmul.mubr.f32.gmra.mrb[0].mxu0 %v86
    %v189 = vpop.f32.mrb[0].mxu0
    %v190 = vadd.f32 0.0, %v189
    %v191 = vpop.f32.mrb[0].mxu0
    %192 = vdwg.mxu0
    %v193 = vld [vmem:[#allocation7] sm:$0xff]
    %v194 = vld [vmem:[#allocation7 + $0x8] sm:$0xff]
    %v195 = vld [vmem:[#allocation7 + $0x10] sm:$0xff]
    %v196 = vld [vmem:[#allocation7 + $0x18] sm:$0xff]
    %v197 = vld [vmem:[#allocation7 + $0x20] sm:$0xff]
    %v198 = vld [vmem:[#allocation7 + $0x28] sm:$0xff]
    %v199 = vld [vmem:[#allocation7 + $0x30] sm:$0xff]
    %v200 = vld [vmem:[#allocation7 + $0x38] sm:$0xff]
    %v201 = vld [vmem:[#allocation7 + $0x40] sm:$0xff]
    %v202 = vld [vmem:[#allocation7 + $0x48] sm:$0xff]
    %v203 = vld [vmem:[#allocation7 + $0x50] sm:$0xff]
    %v204 = vld [vmem:[#allocation7 + $0x58] sm:$0xff]
    %v205 = vld [vmem:[#allocation7 + $0x60] sm:$0xff]
    %v206 = vld [vmem:[#allocation7 + $0x68] sm:$0xff]
    %v207 = vld [vmem:[#allocation7 + $0x70] sm:$0xff]
    %v208 = vld [vmem:[#allocation7 + $0x78] sm:$0xff]
    %v209 = vld [vmem:[#allocation7 + $0x80] sm:$0xff]
    %v210 = vld [vmem:[#allocation7 + $0x88] sm:$0xff]
    %v211 = vld [vmem:[#allocation7 + $0x90] sm:$0xff]
    %v212 = vld [vmem:[#allocation7 + $0x98] sm:$0xff]
    %v213 = vld [vmem:[#allocation7 + $0xa0] sm:$0xff]
    %v214 = vld [vmem:[#allocation7 + $0xa8] sm:$0xff]
    %v215 = vld [vmem:[#allocation7 + $0xb0] sm:$0xff]
    %v216 = vld [vmem:[#allocation7 + $0xb8] sm:$0xff]
    %v217 = vld [vmem:[#allocation7 + $0xc0] sm:$0xff]
    %v218 = vld [vmem:[#allocation7 + $0xc8] sm:$0xff]
    %v219 = vld [vmem:[#allocation7 + $0xd0] sm:$0xff]
    %v220 = vld [vmem:[#allocation7 + $0xd8] sm:$0xff]
    %v221 = vld [vmem:[#allocation7 + $0xe0] sm:$0xff]
    %v222 = vld [vmem:[#allocation7 + $0xe8] sm:$0xff]
    %v223 = vld [vmem:[#allocation7 + $0xf0] sm:$0xff]
    %v224 = vld [vmem:[#allocation7 + $0xf8] sm:$0xff]
    %vm225 = vcmask 523264
    %v227 = vsel %vm225, %v193, 0
    %v230 = vsel %vm225, %v194, 0
    %v233 = vsel %vm225, %v195, 0
    %v236 = vsel %vm225, %v196, 0
    %v239 = vsel %vm225, %v197, 0
    %v242 = vsel %vm225, %v198, 0
    %v245 = vsel %vm225, %v199, 0
    %v248 = vsel %vm225, %v200, 0
    %v251 = vsel %vm225, %v201, 0
    %v254 = vsel %vm225, %v202, 0
    %v257 = vsel %vm225, %v203, 0
    %v260 = vsel %vm225, %v204, 0
    %v263 = vsel %vm225, %v205, 0
    %v266 = vsel %vm225, %v206, 0
    %v269 = vsel %vm225, %v207, 0
    %v272 = vsel %vm225, %v208, 0
    %v275 = vsel %vm225, %v209, 0
    %v278 = vsel %vm225, %v210, 0
    %v281 = vsel %vm225, %v211, 0
    %v284 = vsel %vm225, %v212, 0
    %v287 = vsel %vm225, %v213, 0
    %v290 = vsel %vm225, %v214, 0
    %v293 = vsel %vm225, %v215, 0
    %v296 = vsel %vm225, %v216, 0
    %v299 = vsel %vm225, %v217, 0
    %v302 = vsel %vm225, %v218, 0
    %v305 = vsel %vm225, %v219, 0
    %v308 = vsel %vm225, %v220, 0
    %v311 = vsel %vm225, %v221, 0
    %v314 = vsel %vm225, %v222, 0
    %v317 = vsel %vm225, %v223, 0
    %v320 = vsel %vm225, %v224, 0
    %322 = vmatprep.subr.mxu0 0.0
    %323 = vmatpush1.msra.mxu0 %v155
    %324 = vmatprep.subr.mxu0 0.0
    %325 = vmatpush1.msra.mxu0 %v160
    %326 = vmatprep.subr.mxu0 0.0
    %327 = vmatpush1.msra.mxu0 %v165
    %328 = vmatprep.subr.mxu0 0.0
    %329 = vmatpush1.msra.mxu0 %v170
    %330 = vmatprep.subr.mxu0 0.0
    %331 = vmatpush1.msra.mxu0 %v175
    %332 = vmatprep.subr.mxu0 0.0
    %333 = vmatpush1.msra.mxu0 %v180
    %334 = vmatprep.subr.mxu0 0.0
    %335 = vmatpush1.msra.mxu0 %v185
    %336 = vmatprep.subr.mxu0 0.0
    %337 = vmatpush1.msra.mxu0 %v190
    %338 = vmatprep.subr.mxu0 0.0
    %339 = vmatpush1.msra.mxu0 0.0
    %340 = vmatprep.subr.mxu0 0.0
    %341 = vmatpush1.msra.mxu0 0.0
    %342 = vmatprep.subr.mxu0 0.0
    %343 = vmatpush1.msra.mxu0 0.0
    %344 = vmatprep.subr.mxu0 0.0
    %345 = vmatpush1.msra.mxu0 0.0
    %346 = vmatprep.subr.mxu0 0.0
    %347 = vmatpush1.msra.mxu0 0.0
    %348 = vmatprep.subr.mxu0 0.0
    %349 = vmatpush1.msra.mxu0 0.0
    %350 = vmatprep.subr.mxu0 0.0
    %351 = vmatpush1.msra.mxu0 0.0
    %352 = vmatprep.subr.mxu0 0.0
    %353 = vmatpush1.msra.mxu0 0.0
    %354 = vmatprep.subr.mxu0 0.0
    %355 = vmatpush1.msra.mxu0 0.0
    %356 = vmatprep.subr.mxu0 0.0
    %357 = vmatpush1.msra.mxu0 0.0
    %358 = vmatprep.subr.mxu0 0.0
    %359 = vmatpush1.msra.mxu0 0.0
    %360 = vmatprep.subr.mxu0 0.0
    %361 = vmatpush1.msra.mxu0 0.0
    %362 = vmatprep.subr.mxu0 0.0
    %363 = vmatpush1.msra.mxu0 0.0
    %364 = vmatprep.subr.mxu0 0.0
    %365 = vmatpush1.msra.mxu0 0.0
    %366 = vmatprep.subr.mxu0 0.0
    %367 = vmatpush1.msra.mxu0 0.0
    %368 = vmatprep.subr.mxu0 0.0
    %369 = vmatpush1.msra.mxu0 0.0
    %370 = vmatprep.subr.mxu0 0.0
    %371 = vmatpush1.msra.mxu0 0.0
    %372 = vmatprep.subr.mxu0 0.0
    %373 = vmatpush1.msra.mxu0 0.0
    %374 = vmatprep.subr.mxu0 0.0
    %375 = vmatpush1.msra.mxu0 0.0
    %376 = vmatprep.subr.mxu0 0.0
    %377 = vmatpush1.msra.mxu0 0.0
    %378 = vmatprep.subr.mxu0 0.0
    %379 = vmatpush1.msra.mxu0 0.0
    %380 = vmatprep.subr.mxu0 0.0
    %381 = vmatpush1.msra.mxu0 0.0
    %382 = vmatprep.subr.mxu0 0.0
    %383 = vmatpush1.msra.mxu0 0.0
    %384 = vmatprep.subr.mxu0 0.0
    %385 = vmatpush1.msra.mxu0 0.0
    %386 = vmatprep.mubr.f32.mxu0 0.0
    %387 = vmatmul.mubr.f32.gmra.mrb[0].mxu0 %v227
    %v388 = vpop.f32.mrb[0].mxu0
    %v389 = vadd.f32 0.0, %v388
    %v390 = vpop.f32.mrb[0].mxu0
    %391 = vmatprep.mubr.f32.mxu0 0.0
    %392 = vmatmul.mubr.f32.gmra.mrb[0].mxu0 %v230
    %v393 = vpop.f32.mrb[0].mxu0
    %v394 = vadd.f32 0.0, %v393
    %v395 = vpop.f32.mrb[0].mxu0
    %396 = vmatprep.mubr.f32.mxu0 0.0
    %397 = vmatmul.mubr.f32.gmra.mrb[0].mxu0 %v233
    %v398 = vpop.f32.mrb[0].mxu0
    %v399 = vadd.f32 0.0, %v398
    %v400 = vpop.f32.mrb[0].mxu0
    %401 = vmatprep.mubr.f32.mxu0 0.0
    %402 = vmatmul.mubr.f32.gmra.mrb[0].mxu0 %v236
    %v403 = vpop.f32.mrb[0].mxu0
    %v404 = vadd.f32 0.0, %v403
    %v405 = vpop.f32.mrb[0].mxu0
    %406 = vmatprep.mubr.f32.mxu0 0.0
    %407 = vmatmul.mubr.f32.gmra.mrb[0].mxu0 %v239
    %v408 = vpop.f32.mrb[0].mxu0
    %v409 = vadd.f32 0.0, %v408
    %v410 = vpop.f32.mrb[0].mxu0
    %411 = vmatprep.mubr.f32.mxu0 0.0
    %412 = vmatmul.mubr.f32.gmra.mrb[0].mxu0 %v242
    %v413 = vpop.f32.mrb[0].mxu0
    %v414 = vadd.f32 0.0, %v413
    %v415 = vpop.f32.mrb[0].mxu0
    %416 = vmatprep.mubr.f32.mxu0 0.0
    %417 = vmatmul.mubr.f32.gmra.mrb[0].mxu0 %v245
    %v418 = vpop.f32.mrb[0].mxu0
    %v419 = vadd.f32 0.0, %v418
    %v420 = vpop.f32.mrb[0].mxu0
    %421 = vmatprep.mubr.f32.mxu0 0.0
    %422 = vmatmul.mubr.f32.gmra.mrb[0].mxu0 %v248
    %v423 = vpop.f32.mrb[0].mxu0
    %v424 = vadd.f32 0.0, %v423
    %v425 = vpop.f32.mrb[0].mxu0
    %426 = vmatprep.mubr.f32.mxu0 0.0
    %427 = vmatmul.mubr.f32.gmra.mrb[0].mxu0 %v251
    %v428 = vpop.f32.mrb[0].mxu0
    %v429 = vadd.f32 0.0, %v428
    %v430 = vpop.f32.mrb[0].mxu0
    %431 = vmatprep.mubr.f32.mxu0 0.0
    %432 = vmatmul.mubr.f32.gmra.mrb[0].mxu0 %v254
    %v433 = vpop.f32.mrb[0].mxu0
    %v434 = vadd.f32 0.0, %v433
    %v435 = vpop.f32.mrb[0].mxu0
    %436 = vmatprep.mubr.f32.mxu0 0.0
    %437 = vmatmul.mubr.f32.gmra.mrb[0].mxu0 %v257
    %v438 = vpop.f32.mrb[0].mxu0
    %v439 = vadd.f32 0.0, %v438
    %v440 = vpop.f32.mrb[0].mxu0
    %441 = vmatprep.mubr.f32.mxu0 0.0
    %442 = vmatmul.mubr.f32.gmra.mrb[0].mxu0 %v260
    %v443 = vpop.f32.mrb[0].mxu0
    %v444 = vadd.f32 0.0, %v443
    %v445 = vpop.f32.mrb[0].mxu0
    %446 = vmatprep.mubr.f32.mxu0 0.0
    %447 = vmatmul.mubr.f32.gmra.mrb[0].mxu0 %v263
    %v448 = vpop.f32.mrb[0].mxu0
    %v449 = vadd.f32 0.0, %v448
    %v450 = vpop.f32.mrb[0].mxu0
    %451 = vmatprep.mubr.f32.mxu0 0.0
    %452 = vmatmul.mubr.f32.gmra.mrb[0].mxu0 %v266
    %v453 = vpop.f32.mrb[0].mxu0
    %v454 = vadd.f32 0.0, %v453
    %v455 = vpop.f32.mrb[0].mxu0
    %456 = vmatprep.mubr.f32.mxu0 0.0
    %457 = vmatmul.mubr.f32.gmra.mrb[0].mxu0 %v269
    %v458 = vpop.f32.mrb[0].mxu0
    %v459 = vadd.f32 0.0, %v458
    %v460 = vpop.f32.mrb[0].mxu0
    %461 = vmatprep.mubr.f32.mxu0 0.0
    %462 = vmatmul.mubr.f32.gmra.mrb[0].mxu0 %v272
    %v463 = vpop.f32.mrb[0].mxu0
    %v464 = vadd.f32 0.0, %v463
    %v465 = vpop.f32.mrb[0].mxu0
    %466 = vmatprep.mubr.f32.mxu0 0.0
    %467 = vmatmul.mubr.f32.gmra.mrb[0].mxu0 %v275
    %v468 = vpop.f32.mrb[0].mxu0
    %v469 = vadd.f32 0.0, %v468
    %v470 = vpop.f32.mrb[0].mxu0
    %471 = vmatprep.mubr.f32.mxu0 0.0
    %472 = vmatmul.mubr.f32.gmra.mrb[0].mxu0 %v278
    %v473 = vpop.f32.mrb[0].mxu0
    %v474 = vadd.f32 0.0, %v473
    %v475 = vpop.f32.mrb[0].mxu0
    %476 = vmatprep.mubr.f32.mxu0 0.0
    %477 = vmatmul.mubr.f32.gmra.mrb[0].mxu0 %v281
    %v478 = vpop.f32.mrb[0].mxu0
    %v479 = vadd.f32 0.0, %v478
    %v480 = vpop.f32.mrb[0].mxu0
    %481 = vmatprep.mubr.f32.mxu0 0.0
    %482 = vmatmul.mubr.f32.gmra.mrb[0].mxu0 %v284
    %v483 = vpop.f32.mrb[0].mxu0
    %v484 = vadd.f32 0.0, %v483
    %v485 = vpop.f32.mrb[0].mxu0
    %486 = vmatprep.mubr.f32.mxu0 0.0
    %487 = vmatmul.mubr.f32.gmra.mrb[0].mxu0 %v287
    %v488 = vpop.f32.mrb[0].mxu0
    %v489 = vadd.f32 0.0, %v488
    %v490 = vpop.f32.mrb[0].mxu0
    %491 = vmatprep.mubr.f32.mxu0 0.0
    %492 = vmatmul.mubr.f32.gmra.mrb[0].mxu0 %v290
    %v493 = vpop.f32.mrb[0].mxu0
    %v494 = vadd.f32 0.0, %v493
    %v495 = vpop.f32.mrb[0].mxu0
    %496 = vmatprep.mubr.f32.mxu0 0.0
    %497 = vmatmul.mubr.f32.gmra.mrb[0].mxu0 %v293
    %v498 = vpop.f32.mrb[0].mxu0
    %v499 = vadd.f32 0.0, %v498
    %v500 = vpop.f32.mrb[0].mxu0
    %501 = vmatprep.mubr.f32.mxu0 0.0
    %502 = vmatmul.mubr.f32.gmra.mrb[0].mxu0 %v296
    %v503 = vpop.f32.mrb[0].mxu0
    %v504 = vadd.f32 0.0, %v503
    %v505 = vpop.f32.mrb[0].mxu0
    %506 = vmatprep.mubr.f32.mxu0 0.0
    %507 = vmatmul.mubr.f32.gmra.mrb[0].mxu0 %v299
    %v508 = vpop.f32.mrb[0].mxu0
    %v509 = vadd.f32 0.0, %v508
    %v510 = vpop.f32.mrb[0].mxu0
    %511 = vmatprep.mubr.f32.mxu0 0.0
    %512 = vmatmul.mubr.f32.gmra.mrb[0].mxu0 %v302
    %v513 = vpop.f32.mrb[0].mxu0
    %v514 = vadd.f32 0.0, %v513
    %v515 = vpop.f32.mrb[0].mxu0
    %516 = vmatprep.mubr.f32.mxu0 0.0
    %517 = vmatmul.mubr.f32.gmra.mrb[0].mxu0 %v305
    %v518 = vpop.f32.mrb[0].mxu0
    %v519 = vadd.f32 0.0, %v518
    %v520 = vpop.f32.mrb[0].mxu0
    %521 = vmatprep.mubr.f32.mxu0 0.0
    %522 = vmatmul.mubr.f32.gmra.mrb[0].mxu0 %v308
    %v523 = vpop.f32.mrb[0].mxu0
    %v524 = vadd.f32 0.0, %v523
    %v525 = vpop.f32.mrb[0].mxu0
    %526 = vmatprep.mubr.f32.mxu0 0.0
    %527 = vmatmul.mubr.f32.gmra.mrb[0].mxu0 %v311
    %v528 = vpop.f32.mrb[0].mxu0
    %v529 = vadd.f32 0.0, %v528
    %v530 = vpop.f32.mrb[0].mxu0
    %531 = vmatprep.mubr.f32.mxu0 0.0
    %532 = vmatmul.mubr.f32.gmra.mrb[0].mxu0 %v314
    %v533 = vpop.f32.mrb[0].mxu0
    %v534 = vadd.f32 0.0, %v533
    %v535 = vpop.f32.mrb[0].mxu0
    %536 = vmatprep.mubr.f32.mxu0 0.0
    %537 = vmatmul.mubr.f32.gmra.mrb[0].mxu0 %v317
    %v538 = vpop.f32.mrb[0].mxu0
    %v539 = vadd.f32 0.0, %v538
    %v540 = vpop.f32.mrb[0].mxu0
    %541 = vmatprep.mubr.f32.mxu0 0.0
    %542 = vmatmul.mubr.f32.gmra.mrb[0].mxu0 %v320
    %v543 = vpop.f32.mrb[0].mxu0
    %v544 = vadd.f32 0.0, %v543
    %v545 = vpop.f32.mrb[0].mxu0
    %546 = vdwg.mxu0
    %vm547 = vcmask 261120
    %548 = vst.msk [vmem:[#allocation8] sm:$0xff] %vm547, %v389
    %549 = vst.msk [vmem:[#allocation8 + $0x8] sm:$0xff] %vm547, %v394
    %550 = vst.msk [vmem:[#allocation8 + $0x10] sm:$0xff] %vm547, %v399
    %551 = vst.msk [vmem:[#allocation8 + $0x18] sm:$0xff] %vm547, %v404
    %552 = vst.msk [vmem:[#allocation8 + $0x20] sm:$0xff] %vm547, %v409
    %553 = vst.msk [vmem:[#allocation8 + $0x28] sm:$0xff] %vm547, %v414
    %554 = vst.msk [vmem:[#allocation8 + $0x30] sm:$0xff] %vm547, %v419
    %555 = vst.msk [vmem:[#allocation8 + $0x38] sm:$0xff] %vm547, %v424
    %556 = vst.msk [vmem:[#allocation8 + $0x40] sm:$0xff] %vm547, %v429
    %557 = vst.msk [vmem:[#allocation8 + $0x48] sm:$0xff] %vm547, %v434
    %558 = vst.msk [vmem:[#allocation8 + $0x50] sm:$0xff] %vm547, %v439
    %559 = vst.msk [vmem:[#allocation8 + $0x58] sm:$0xff] %vm547, %v444
    %560 = vst.msk [vmem:[#allocation8 + $0x60] sm:$0xff] %vm547, %v449
    %561 = vst.msk [vmem:[#allocation8 + $0x68] sm:$0xff] %vm547, %v454
    %562 = vst.msk [vmem:[#allocation8 + $0x70] sm:$0xff] %vm547, %v459
    %563 = vst.msk [vmem:[#allocation8 + $0x78] sm:$0xff] %vm547, %v464
    %564 = vst.msk [vmem:[#allocation8 + $0x80] sm:$0xff] %vm547, %v469
    %565 = vst.msk [vmem:[#allocation8 + $0x88] sm:$0xff] %vm547, %v474
    %566 = vst.msk [vmem:[#allocation8 + $0x90] sm:$0xff] %vm547, %v479
    %567 = vst.msk [vmem:[#allocation8 + $0x98] sm:$0xff] %vm547, %v484
    %568 = vst.msk [vmem:[#allocation8 + $0xa0] sm:$0xff] %vm547, %v489
    %569 = vst.msk [vmem:[#allocation8 + $0xa8] sm:$0xff] %vm547, %v494
    %570 = vst.msk [vmem:[#allocation8 + $0xb0] sm:$0xff] %vm547, %v499
    %571 = vst.msk [vmem:[#allocation8 + $0xb8] sm:$0xff] %vm547, %v504
    %572 = vst.msk [vmem:[#allocation8 + $0xc0] sm:$0xff] %vm547, %v509
    %573 = vst.msk [vmem:[#allocation8 + $0xc8] sm:$0xff] %vm547, %v514
    %574 = vst.msk [vmem:[#allocation8 + $0xd0] sm:$0xff] %vm547, %v519
    %575 = vst.msk [vmem:[#allocation8 + $0xd8] sm:$0xff] %vm547, %v524
    %576 = vst.msk [vmem:[#allocation8 + $0xe0] sm:$0xff] %vm547, %v529
    %577 = vst.msk [vmem:[#allocation8 + $0xe8] sm:$0xff] %vm547, %v534
    %578 = vst.msk [vmem:[#allocation8 + $0xf0] sm:$0xff] %vm547, %v539
    %579 = vst.msk [vmem:[#allocation8 + $0xf8] sm:$0xff] %vm547, %v544
    // Predicated region
    $region26: #{adapter_forward.1} parent=1 // pred_check
      _
    $region27: #{adapter_forward.1} parent=1 // pred_check_branch
      %581 = sbr.rel (0) target = $region29
    $region28: #{adapter_forward.1} parent=1 // pred_region
      %s583 = ssub.s32 4096, 4096
      %584 = vsyncadd [#allocation4], %s583
      %s585 = sshll.u32 [#allocation8], 4
      %s586 = int_to_ptr.vmem [resolvable:$true] %s585
      %591 = dma.vmem_to_hbm [thread:$0]  %s586, 4096, %s3, [#allocation4], 128, 128, 8
    $region29: #{adapter_forward.1} parent=1 // pred_fallthru
      _
    // Predicated region
    $region30: #{adapter_forward.1} parent=1 // pred_check
      _
    $region31: #{adapter_forward.1} parent=1 // pred_check_branch
      %593 = sbr.rel (0) target = $region33
    $region32: #{adapter_forward.1} parent=1 // pred_region
      %594 = dma.done [#allocation4], 4096
    $region33: #{adapter_forward.1} parent=1 // pred_fallthru
      _
    %595 = vsyncpa [#allocation3], 1
    %596 = vsyncpa [#allocation6], 1
    %597 = vsyncpa [#allocation4], 1

</llo_original>
